<compile_context>
chip_gen: v7x
topology: tpu7x:2x2x1
jax: 0.10.0
libtpu: 0.0.40
codegen_flags: <defaults>
</compile_context>

<pallas_src>
import math
import numpy as np
import jax
import jax.numpy as jnp
from jax.experimental import pallas as pl
from jax.experimental.pallas import tpu as pltpu

# ---- model constants (fixed by the PyTorch module) ----
FEEDBACK_BITS = 128          # free parameter of Decoder(feedback_bits); must be even
NUM_QUAN_BITS = 2
FC_IN = FEEDBACK_BITS // NUM_QUAN_BITS   # 64
FC_OUT = 768
SEQ = 12
VOCAB = 64                   # src_vocab_size
D = 384                      # model_dimension
HEADS = 8
HEAD_DIM = D // HEADS        # 48
FF = 4 * D                   # 1536
LAYERS = 6
SQRT_D = math.sqrt(D)
INV_SQRT_HD = 1.0 / math.sqrt(HEAD_DIM)
EPS = 1e-5                   # nn.LayerNorm default
NEG_INF = -1e30


# ----------------------------------------------------------------------------
# Kernel 1: dequantization arithmetic + fc Linear(64 -> 768)
# ----------------------------------------------------------------------------
def fc_kernel(hi_ref, lo_ref, wfc_ref, bfc_ref, out_ref):
    # Bit2Num with B=2: num = 2*hi + lo ; deq = (num + 0.5)/4 ; then -0.5
    deq = (hi_ref[...] * 2.0 + lo_ref[...] + 0.5) * 0.25 - 0.5
    out_ref[...] = (
        jnp.dot(deq, wfc_ref[...], preferred_element_type=jnp.float32)
        + bfc_ref[...]
    )


# ----------------------------------------------------------------------------
# Kernel 2: embedding + positional encoding + 6 transformer encoder layers
#           + final LayerNorm + Linear(384 -> 64)
# grid = (LAYERS,); whole batch processed per step; representation carried in
# a (B*SEQ, D) VMEM scratch buffer.
# ----------------------------------------------------------------------------
def _layernorm(x, g, b):
    mu = jnp.mean(x, axis=-1, keepdims=True)
    var = jnp.mean(jnp.square(x - mu), axis=-1, keepdims=True)
    return (x - mu) * jax.lax.rsqrt(var + EPS) * g + b


def encoder_kernel(tok_ref, wemb_ref, bemb_ref, pos_ref, neg_ref,
                   ln1_ref, wqkv_ref, bqkv_ref, wo_ref, bo_ref,
                   ln2_ref, w1_ref, b1_ref, w2_ref, b2_ref,
                   lnf_ref, wout_ref, bout_ref,
                   out_ref, carry_ref):
    layer = pl.program_id(0)
    BS = carry_ref.shape[0]                                  # batch * SEQ

    # ---- prologue (first layer only): embedding + positional encoding ----
    @pl.when(layer == 0)
    def _embed():
        emb = jnp.dot(tok_ref[...].astype(jnp.bfloat16), wemb_ref[...],
                      preferred_element_type=jnp.float32)    # (BS, 384)
        emb = (emb + bemb_ref[...]) * SQRT_D
        carry_ref[...] = emb + pos_ref[...]

    x = carry_ref[...]                                       # (BS, 384) f32

    # ---- sublayer 0: pre-LN multi-head self-attention + residual ----
    ln1 = ln1_ref[layer]                                     # (2, 384)
    xn = _layernorm(x, ln1[0:1, :], ln1[1:2, :])

    # fused Q|K|V projection: one (BS,384) @ (384,1152) bf16 matmul
    qkv = (jnp.dot(xn.astype(jnp.bfloat16), wqkv_ref[0],
                   preferred_element_type=jnp.float32)
           + bqkv_ref[layer])                                # (BS, 1152) f32

    neg = neg_ref[...]                                       # (BS, BS) additive mask
    attn = jnp.zeros((BS, D), dtype=jnp.float32)
    for h in range(HEADS):                                   # static unroll
        s0 = h * HEAD_DIM
        qh = qkv[:, s0:s0 + HEAD_DIM]                        # (BS, 48)
        kh = qkv[:, D + s0:D + s0 + HEAD_DIM]
        vh = qkv[:, 2 * D + s0:2 * D + s0 + HEAD_DIM]
        sc = jax.lax.dot_general(qh, kh, (((1,), (1,)), ((), ())),
                                 preferred_element_type=jnp.float32)
        sc = sc * INV_SQRT_HD + neg                          # block-diag over batch
        sc = sc - jnp.max(sc, axis=-1, keepdims=True)
        e = jnp.exp(sc)
        p = e * pl.reciprocal(jnp.sum(e, axis=-1, keepdims=True), approx=True)
        oh = jnp.dot(p, vh, preferred_element_type=jnp.float32)   # (BS, 48)
        # project each head output directly (avoids an in-kernel concat);
        # Wo row slices (48 rows) are sublane-aligned.
        attn = attn + jnp.dot(oh.astype(jnp.bfloat16),
                              wo_ref[0, s0:s0 + HEAD_DIM, :],
                              preferred_element_type=jnp.float32)
    x = x + attn + bo_ref[layer]

    # ---- sublayer 1: pre-LN position-wise feed-forward + residual ----
    ln2 = ln2_ref[layer]
    xn2 = _layernorm(x, ln2[0:1, :], ln2[1:2, :])
    h1 = (jnp.dot(xn2.astype(jnp.bfloat16), w1_ref[0],
                  preferred_element_type=jnp.float32) + b1_ref[layer])
    h1 = jnp.maximum(h1, 0.0)                                # ReLU
    ff = (jnp.dot(h1.astype(jnp.bfloat16), w2_ref[0],
                  preferred_element_type=jnp.float32) + b2_ref[layer])
    x = x + ff

    carry_ref[...] = x

    # ---- epilogue (last layer only): final LN + Linear(384 -> 64) ----
    @pl.when(layer == pl.num_programs(0) - 1)
    def _final():
        lnf = lnf_ref[...]
        xf = _layernorm(x, lnf[0:1, :], lnf[1:2, :])
        out_ref[...] = (jnp.dot(xf.astype(jnp.bfloat16), wout_ref[...],
                                preferred_element_type=jnp.float32)
                        + bout_ref[...])                     # (BS, 64)


# ----------------------------------------------------------------------------
# Wrapper
# ----------------------------------------------------------------------------
def decoder_forward(bits, p):
    batch = bits.shape[0]
    BS = batch * SEQ

    # Bit splitting (pure indexing glue); arithmetic is inside fc_kernel.
    hi = bits[:, 0::2]
    lo = bits[:, 1::2]

    fc_out = pl.pallas_call(
        fc_kernel,
        out_shape=jax.ShapeDtypeStruct((batch, FC_OUT), jnp.float32),
    )(hi, lo, p["W_fc"], p["b_fc"])

    tok = fc_out.reshape(BS, VOCAB)                          # view(-1, 12, 64) flattened

    # host-side glue (tiny): positional table tiled over batch + the additive
    # block-diagonal mask that keeps attention within each batch element after
    # the batch is folded into the M dimension.
    pos = jnp.tile(p["pos"], (batch, 1))                     # (BS, 384)
    bid = jnp.repeat(jnp.arange(batch, dtype=jnp.int32), SEQ)
    neg = jnp.where(bid[:, None] == bid[None, :], 0.0, NEG_INF).astype(jnp.float32)

    def const_spec(a):
        n = a.ndim
        return pl.BlockSpec(a.shape, lambda l, n=n: (0,) * n)

    def layer_spec(a):                                       # streamed per layer
        return pl.BlockSpec((1,) + a.shape[1:], lambda l: (l, 0, 0))

    in_specs = [
        const_spec(tok),                                     # tok
        const_spec(p["W_emb"]), const_spec(p["b_emb"]),      # embedding
        const_spec(pos), const_spec(neg),                    # pos table, batch mask
        const_spec(p["ln1"]),                                # (L,2,D) LN1 g/b
        layer_spec(p["Wqkv"]), const_spec(p["bqkv"]),        # fused QKV
        layer_spec(p["Wo"]),   const_spec(p["bo"]),          # out projection
        const_spec(p["ln2"]),                                # (L,2,D) LN2 g/b
        layer_spec(p["W1"]),   const_spec(p["b1"]),          # FFN 1
        layer_spec(p["W2"]),   const_spec(p["b2"]),          # FFN 2
        const_spec(p["lnf"]),                                # final LN g/b
        const_spec(p["W_out"]), const_spec(p["b_out"]),      # final Linear
    ]

    out = pl.pallas_call(
        encoder_kernel,
        out_shape=jax.ShapeDtypeStruct((BS, VOCAB), jnp.float32),
        grid_spec=pltpu.PrefetchScalarGridSpec(
            num_scalar_prefetch=0,
            grid=(LAYERS,),
            in_specs=in_specs,
            out_specs=pl.BlockSpec((BS, VOCAB), lambda l: (0, 0)),
            scratch_shapes=[pltpu.VMEM((BS, D), jnp.float32)],
        ),
        compiler_params=pltpu.CompilerParams(
            dimension_semantics=("arbitrary",),
            vmem_limit_bytes=32 * 1024 * 1024,               # fits v7x (64 MiB) too
        ),
    )(tok, p["W_emb"], p["b_emb"], pos, neg,
      p["ln1"], p["Wqkv"], p["bqkv"], p["Wo"], p["bo"],
      p["ln2"], p["W1"], p["b1"], p["W2"], p["b2"],
      p["lnf"], p["W_out"], p["b_out"])

    return out.reshape(batch, SEQ * VOCAB)                   # view(-1, 768)


# ----------------------------------------------------------------------------
# Parameter init (deterministic, synthetic)
# ----------------------------------------------------------------------------
def init_params(key):
    key_holder = [key]

    def nxt():
        key_holder[0], sub = jax.random.split(key_holder[0])
        return sub

    def linear(fan_in, fan_out):
        bound = 1.0 / math.sqrt(fan_in)
        w = jax.random.uniform(nxt(), (fan_in, fan_out), jnp.float32, -bound, bound)
        b = jax.random.uniform(nxt(), (1, fan_out), jnp.float32, -bound, bound)
        return w, b

    p = {}
    p["W_fc"], p["b_fc"] = linear(FC_IN, FC_OUT)             # f32 (tiny)
    w, b = linear(VOCAB, D)
    p["W_emb"] = w.astype(jnp.bfloat16)
    p["b_emb"] = b

    # positional encoding table (first SEQ rows)
    pos_id = jnp.arange(SEQ, dtype=jnp.float32)[:, None]
    freqs = jnp.power(10000.0, -jnp.arange(0, D, 2, dtype=jnp.float32) / D)
    pe = jnp.zeros((SEQ, D), jnp.float32)
    pe = pe.at[:, 0::2].set(jnp.sin(pos_id * freqs))
    pe = pe.at[:, 1::2].set(jnp.cos(pos_id * freqs))
    p["pos"] = pe

    # per-layer encoder weights (stacked along a leading layer axis).
    # NOTE: the PyTorch module deep-copies one EncoderLayer, so at init all 6
    # layers share identical weights; distinct random weights here leave the
    # forward semantics unchanged.
    Wqkv, bqkv, Wo, bo, W1, b1, W2, b2 = ([] for _ in range(8))
    for _ in range(LAYERS):
        wq, bq_ = linear(D, D)
        wk, bk_ = linear(D, D)
        wv, bv_ = linear(D, D)
        Wqkv.append(jnp.concatenate([wq, wk, wv], axis=1))   # (384, 1152)
        bqkv.append(jnp.concatenate([bq_, bk_, bv_], axis=1))
        w, b = linear(D, D);   Wo.append(w); bo.append(b)
        w, b = linear(D, FF);  W1.append(w); b1.append(b)
        w, b = linear(FF, D);  W2.append(w); b2.append(b)

    p["Wqkv"] = jnp.stack(Wqkv).astype(jnp.bfloat16)         # (L, 384, 1152)
    p["bqkv"] = jnp.stack(bqkv)                              # (L, 1, 1152) f32
    p["Wo"] = jnp.stack(Wo).astype(jnp.bfloat16)             # (L, 384, 384)
    p["bo"] = jnp.stack(bo)
    p["W1"] = jnp.stack(W1).astype(jnp.bfloat16)             # (L, 384, 1536)
    p["b1"] = jnp.stack(b1)
    p["W2"] = jnp.stack(W2).astype(jnp.bfloat16)             # (L, 1536, 384)
    p["b2"] = jnp.stack(b2)

    ones = jnp.ones((LAYERS, 1, D), jnp.float32)
    zeros = jnp.zeros((LAYERS, 1, D), jnp.float32)
    p["ln1"] = jnp.concatenate([ones, zeros], axis=1)        # (L, 2, 384): [gamma; beta]
    p["ln2"] = jnp.concatenate([ones, zeros], axis=1)
    p["lnf"] = jnp.stack([jnp.ones((D,), jnp.float32),
                          jnp.zeros((D,), jnp.float32)])     # (2, 384)

    w, b = linear(D, VOCAB)
    p["W_out"] = w.astype(jnp.bfloat16)
    p["b_out"] = b
    return p


# ----------------------------------------------------------------------------
# Pure-JAX reference (mirrors the PyTorch forward; weights upcast to f32)
# ----------------------------------------------------------------------------
def reference_forward(bits, p):
    hp = jax.lax.Precision.HIGHEST
    f32 = lambda a: a.astype(jnp.float32)
    B = bits.shape[0]
    hi = bits[:, 0::2]
    lo = bits[:, 1::2]
    deq = (hi * 2.0 + lo + 0.5) / 4.0 - 0.5
    h = jnp.dot(deq, p["W_fc"], precision=hp) + p["b_fc"]
    x = h.reshape(B, SEQ, VOCAB)
    x = (jnp.dot(x, f32(p["W_emb"]), precision=hp) + p["b_emb"]) * SQRT_D
    x = x + p["pos"][None]

    def ln(y, g, b):
        mu = jnp.mean(y, axis=-1, keepdims=True)
        var = jnp.mean(jnp.square(y - mu), axis=-1, keepdims=True)
        return (y - mu) * jax.lax.rsqrt(var + EPS) * g + b

    for li in range(LAYERS):
        Wqkv = f32(p["Wqkv"][li])
        xn = ln(x, p["ln1"][li, 0], p["ln1"][li, 1])
        qkv = jnp.dot(xn, Wqkv, precision=hp) + p["bqkv"][li]
        q, k, v = qkv[..., :D], qkv[..., D:2 * D], qkv[..., 2 * D:]
        q = q.reshape(B, SEQ, HEADS, HEAD_DIM).transpose(0, 2, 1, 3)
        k = k.reshape(B, SEQ, HEADS, HEAD_DIM).transpose(0, 2, 1, 3)
        v = v.reshape(B, SEQ, HEADS, HEAD_DIM).transpose(0, 2, 1, 3)
        sc = jnp.einsum("bhsd,bhtd->bhst", q, k, precision=hp) * INV_SQRT_HD
        pr = jax.nn.softmax(sc, axis=-1)
        o = jnp.einsum("bhst,bhtd->bhsd", pr, v, precision=hp)
        o = o.transpose(0, 2, 1, 3).reshape(B, SEQ, D)
        x = x + jnp.dot(o, f32(p["Wo"][li]), precision=hp) + p["bo"][li]
        xn2 = ln(x, p["ln2"][li, 0], p["ln2"][li, 1])
        hh = jax.nn.relu(jnp.dot(xn2, f32(p["W1"][li]), precision=hp) + p["b1"][li])
        x = x + jnp.dot(hh, f32(p["W2"][li]), precision=hp) + p["b2"][li]
    x = ln(x, p["lnf"][0], p["lnf"][1])
    out = jnp.dot(x, f32(p["W_out"]), precision=hp) + p["b_out"]
    return out.reshape(B, SEQ * VOCAB)


if __name__ == "__main__":
    BATCH = 2
    key = jax.random.PRNGKey(0)
    k_bits, k_params = jax.random.split(key)
    # feedback bits in {0, 1} (as float), shape (batch, feedback_bits)
    bits = jax.random.bernoulli(k_bits, 0.5, (BATCH, FEEDBACK_BITS)).astype(jnp.float32)
    params = init_params(k_params)

    out = decoder_forward(bits, params)
    out = jax.block_until_ready(out)

    assert out.shape == (BATCH, 768), out.shape
    ref = jax.block_until_ready(reference_forward(bits, params))
    np.testing.assert_allclose(np.asarray(out), np.asarray(ref), rtol=5e-2, atol=5e-2)

    print("KERNEL_OK")
</pallas_src>

<mosaic_0001>
module attributes {stable_mosaic.version = 11 : i64} {
  func.func @fc_kernel(%arg0: memref<2x64xf32, #tpu.memory_space<vmem>>, %arg1: memref<2x64xf32, #tpu.memory_space<vmem>>, %arg2: memref<64x768xf32, #tpu.memory_space<vmem>>, %arg3: memref<1x768xf32, #tpu.memory_space<vmem>>, %arg4: memref<2x768xf32, #tpu.memory_space<vmem>>) attributes {dimension_semantics = [], scalar_prefetch = 0 : i64, scratch_operands = 0 : i64, tpu.core_type = #tpu.core_type<tc>} {
    %c0 = arith.constant 0 : index
    %c0_0 = arith.constant 0 : index
    %0 = vector.load %arg0[%c0, %c0_0] : memref<2x64xf32, #tpu.memory_space<vmem>>, vector<2x64xf32>
    %cst = arith.constant 2.000000e+00 : f32
    %1 = vector.broadcast %cst : f32 to vector<2x64xf32>
    %2 = arith.mulf %0, %1 : vector<2x64xf32>
    %c0_1 = arith.constant 0 : index
    %c0_2 = arith.constant 0 : index
    %3 = vector.load %arg1[%c0_1, %c0_2] : memref<2x64xf32, #tpu.memory_space<vmem>>, vector<2x64xf32>
    %4 = arith.addf %2, %3 : vector<2x64xf32>
    %cst_3 = arith.constant 5.000000e-01 : f32
    %5 = vector.broadcast %cst_3 : f32 to vector<2x64xf32>
    %6 = arith.addf %4, %5 : vector<2x64xf32>
    %cst_4 = arith.constant 2.500000e-01 : f32
    %7 = vector.broadcast %cst_4 : f32 to vector<2x64xf32>
    %8 = arith.mulf %6, %7 : vector<2x64xf32>
    %cst_5 = arith.constant 5.000000e-01 : f32
    %9 = vector.broadcast %cst_5 : f32 to vector<2x64xf32>
    %10 = arith.subf %8, %9 : vector<2x64xf32>
    %c0_6 = arith.constant 0 : index
    %c0_7 = arith.constant 0 : index
    %11 = vector.load %arg2[%c0_6, %c0_7] : memref<64x768xf32, #tpu.memory_space<vmem>>, vector<64x768xf32>
    %cst_8 = arith.constant dense<0.000000e+00> : vector<2x768xf32>
    %12 = tpu.matmul %10, %11, %cst_8 {dimension_numbers = #tpu.dot_dimension_numbers<[1], [0], [0], [1], [0, 0, 1, 1], [], []>} : vector<2x64xf32>, vector<64x768xf32>, vector<2x768xf32> -> vector<2x768xf32>
    %c0_9 = arith.constant 0 : index
    %c0_10 = arith.constant 0 : index
    %13 = vector.load %arg3[%c0_9, %c0_10] : memref<1x768xf32, #tpu.memory_space<vmem>>, vector<1x768xf32>
    %14 = vector.broadcast %13 : vector<1x768xf32> to vector<2x768xf32>
    %15 = arith.addf %12, %14 : vector<2x768xf32>
    %c0_11 = arith.constant 0 : index
    %c0_12 = arith.constant 0 : index
    %16 = vector.load %arg4[%c0_11, %c0_12] : memref<2x768xf32, #tpu.memory_space<vmem>>, vector<2x768xf32>
    tpu.vector_store %arg4[%c0_11, %c0_12], %15 {strides = array<i32>} : memref<2x768xf32, #tpu.memory_space<vmem>>, vector<2x768xf32>,
    return
  }
}

</mosaic_0001>

<llo_original>
// kernel: tpu_custom_call.1
$region0: #{tpu_custom_call.1}
  #allocation0 [shape = 'u32[]', space=smem, size = 0x4, offset = 0x4, fixed_abs, tag = 'smem constant byte address 0x4 - core index']
  #allocation1 [shape = 'u32[144,128]{1,0:T(1,128)}', space=vmem, size = 0x12000, scoped, tag = 'internal scratch']
  %s0 = inlined_call_operand.hbm [shape: f32[2,64], index: 0, kind: input, shape index: {}]
  %s1 = inlined_call_operand.vmem [shape: f32[2,64], index: 1, kind: input, shape index: {}]
  %s2 = inlined_call_operand.hbm [shape: f32[64,768], index: 2, kind: input, shape index: {}]
  %s3 = inlined_call_operand.vmem [shape: f32[1,768], index: 3, kind: input, shape index: {}]
  %s4 = inlined_call_operand.hbm [shape: f32[2,768], index: 4, kind: output, shape index: {}]
  %s5 = sld [smem:[#allocation0]]
  $region34: #{tpu_custom_call.1} parent=0
    _
  %s7 = ssub.s32 1, %s5
  %s8 = scalar_select 0, %s7, %s5
  $region1: #{tpu_custom_call.1} parent=0
    #allocation2 [shape = 'u8[1024]{0}', space=vmem, size = 0x400, scoped, tag = 'input window, operand 0, single buffered']
    #allocation3 [shape = 's32[1]{0}', space=sflag, size = 0x4, scoped, tag = 'scoped memory for tpu_custom_call.1']
    #allocation4 [shape = 's32[1]{0}', space=sflag, size = 0x4, scoped, tag = 'scoped memory for tpu_custom_call.1']
    #allocation5 [shape = 'u8[196608]{0}', space=vmem, size = 0x30000, scoped, tag = 'input window, operand 2, single buffered']
    #allocation6 [shape = 's32[1]{0}', space=sflag, size = 0x4, scoped, tag = 'scoped memory for tpu_custom_call.1']
    #allocation7 [shape = 'u8[6144]{0}', space=vmem, size = 0x1800, scoped, tag = 'output window, operand 0, single buffered']
    %9 = vsyncpa [#allocation3], 0
    %10 = vsyncpa [#allocation6], 0
    %11 = vsyncpa [#allocation4], 0
    // Predicated region
    $region2: #{tpu_custom_call.1} parent=1 // pred_check
      _
    $region3: #{tpu_custom_call.1} parent=1 // pred_check_branch
      %13 = sbr.rel (0) target = $region5
    $region4: #{tpu_custom_call.1} parent=1 // pred_region
      %s15 = ssub.s32 32, 32
      %16 = vsyncadd [#allocation3], %s15
      %s18 = sshll.u32 [#allocation2], 4
      %s19 = int_to_ptr.vmem [resolvable:$true] %s18
      %21 = dma.hbm_to_vmem [thread:$0]  %s0, 32, %s19, [#allocation3]
    $region5: #{tpu_custom_call.1} parent=1 // pred_fallthru
      _
    // Predicated region
    $region6: #{tpu_custom_call.1} parent=1 // pred_check
      _
    $region7: #{tpu_custom_call.1} parent=1 // pred_check_branch
      %23 = sbr.rel (0) target = $region9
    $region8: #{tpu_custom_call.1} parent=1 // pred_region
      _
    $region9: #{tpu_custom_call.1} parent=1 // pred_fallthru
      _
    // Predicated region
    $region10: #{tpu_custom_call.1} parent=1 // pred_check
      _
    $region11: #{tpu_custom_call.1} parent=1 // pred_check_branch
      %25 = sbr.rel (0) target = $region13
    $region12: #{tpu_custom_call.1} parent=1 // pred_region
      %s27 = ssub.s32 6144, 6144
      %28 = vsyncadd [#allocation6], %s27
      %s29 = sshll.u32 [#allocation5], 4
      %s30 = int_to_ptr.vmem [resolvable:$true] %s29
      %35 = dma.hbm_to_vmem [thread:$0]  %s2, 6144, %s30, [#allocation6], 768, 768, 48
    $region13: #{tpu_custom_call.1} parent=1 // pred_fallthru
      _
    // Predicated region
    $region14: #{tpu_custom_call.1} parent=1 // pred_check
      _
    $region15: #{tpu_custom_call.1} parent=1 // pred_check_branch
      %37 = sbr.rel (0) target = $region17
    $region16: #{tpu_custom_call.1} parent=1 // pred_region
      _
    $region17: #{tpu_custom_call.1} parent=1 // pred_fallthru
      _
    // Predicated region
    $region18: #{tpu_custom_call.1} parent=1 // pred_check
      _
    $region19: #{tpu_custom_call.1} parent=1 // pred_check_branch
      %39 = sbr.rel (0) target = $region21
    $region20: #{tpu_custom_call.1} parent=1 // pred_region
      %40 = dma.done [#allocation3], 32
    $region21: #{tpu_custom_call.1} parent=1 // pred_fallthru
      _
    // Predicated region
    $region22: #{tpu_custom_call.1} parent=1 // pred_check
      _
    $region23: #{tpu_custom_call.1} parent=1 // pred_check_branch
      %42 = sbr.rel (0) target = $region25
    $region24: #{tpu_custom_call.1} parent=1 // pred_region
      %43 = dma.done [#allocation6], 6144
    $region25: #{tpu_custom_call.1} parent=1 // pred_fallthru
      _
    %v44 = vld [vmem:[#allocation2] sm:$0x3]
    %v45 = vmul.f32 %v44, 2.0
    %v46 = vld [vmem:[%s1] sm:$0x3]
    %v47 = vadd.f32 %v45, %v46
    %v48 = vadd.f32 %v47, 0.5
    %v49 = vmul.f32 %v48, 0.25
    %v50 = vsub.f32 %v49, 0.5
    %v51 = vld [vmem:[#allocation5] sm:$0xff]
    %v52 = vld [vmem:[#allocation5 + $0x8] sm:$0xff]
    %v53 = vld [vmem:[#allocation5 + $0x10] sm:$0xff]
    %v54 = vld [vmem:[#allocation5 + $0x18] sm:$0xff]
    %v55 = vld [vmem:[#allocation5 + $0x20] sm:$0xff]
    %v56 = vld [vmem:[#allocation5 + $0x28] sm:$0xff]
    %v57 = vld [vmem:[#allocation5 + $0x30] sm:$0xff]
    %v58 = vld [vmem:[#allocation5 + $0x38] sm:$0xff]
    %v59 = vld [vmem:[#allocation5 + $0x40] sm:$0xff]
    %v60 = vld [vmem:[#allocation5 + $0x48] sm:$0xff]
    %v61 = vld [vmem:[#allocation5 + $0x50] sm:$0xff]
    %v62 = vld [vmem:[#allocation5 + $0x58] sm:$0xff]
    %v63 = vld [vmem:[#allocation5 + $0x60] sm:$0xff]
    %v64 = vld [vmem:[#allocation5 + $0x68] sm:$0xff]
    %v65 = vld [vmem:[#allocation5 + $0x70] sm:$0xff]
    %v66 = vld [vmem:[#allocation5 + $0x78] sm:$0xff]
    %v67 = vld [vmem:[#allocation5 + $0x80] sm:$0xff]
    %v68 = vld [vmem:[#allocation5 + $0x88] sm:$0xff]
    %v69 = vld [vmem:[#allocation5 + $0x90] sm:$0xff]
    %v70 = vld [vmem:[#allocation5 + $0x98] sm:$0xff]
    %v71 = vld [vmem:[#allocation5 + $0xa0] sm:$0xff]
    %v72 = vld [vmem:[#allocation5 + $0xa8] sm:$0xff]
    %v73 = vld [vmem:[#allocation5 + $0xb0] sm:$0xff]
    %v74 = vld [vmem:[#allocation5 + $0xb8] sm:$0xff]
    %v75 = vld [vmem:[#allocation5 + $0xc0] sm:$0xff]
    %v76 = vld [vmem:[#allocation5 + $0xc8] sm:$0xff]
    %v77 = vld [vmem:[#allocation5 + $0xd0] sm:$0xff]
    %v78 = vld [vmem:[#allocation5 + $0xd8] sm:$0xff]
    %v79 = vld [vmem:[#allocation5 + $0xe0] sm:$0xff]
    %v80 = vld [vmem:[#allocation5 + $0xe8] sm:$0xff]
    %v81 = vld [vmem:[#allocation5 + $0xf0] sm:$0xff]
    %v82 = vld [vmem:[#allocation5 + $0xf8] sm:$0xff]
    %v83 = vld [vmem:[#allocation5 + $0x100] sm:$0xff]
    %v84 = vld [vmem:[#allocation5 + $0x108] sm:$0xff]
    %v85 = vld [vmem:[#allocation5 + $0x110] sm:$0xff]
    %v86 = vld [vmem:[#allocation5 + $0x118] sm:$0xff]
    %v87 = vld [vmem:[#allocation5 + $0x120] sm:$0xff]
    %v88 = vld [vmem:[#allocation5 + $0x128] sm:$0xff]
    %v89 = vld [vmem:[#allocation5 + $0x130] sm:$0xff]
    %v90 = vld [vmem:[#allocation5 + $0x138] sm:$0xff]
    %v91 = vld [vmem:[#allocation5 + $0x140] sm:$0xff]
    %v92 = vld [vmem:[#allocation5 + $0x148] sm:$0xff]
    %v93 = vld [vmem:[#allocation5 + $0x150] sm:$0xff]
    %v94 = vld [vmem:[#allocation5 + $0x158] sm:$0xff]
    %v95 = vld [vmem:[#allocation5 + $0x160] sm:$0xff]
    %v96 = vld [vmem:[#allocation5 + $0x168] sm:$0xff]
    %v97 = vld [vmem:[#allocation5 + $0x170] sm:$0xff]
    %v98 = vld [vmem:[#allocation5 + $0x178] sm:$0xff]
    %v99 = vld [vmem:[%s3] sm:$0x3f]
    %v101 = vlaneseq
    %v102 = vshrl.u32 %v101, 7
    %v103 = vsub.s32 0, %v102
    %v104 = vrot.slane %v99, %v103
    %v105 = vlaneseq
    %v106 = vshrl.u32 %v105, 7
    %v107 = vsub.s32 1, %v106
    %v108 = vrot.slane %v99, %v107
    %v109 = vlaneseq
    %v110 = vshrl.u32 %v109, 7
    %v111 = vsub.s32 2, %v110
    %v112 = vrot.slane %v99, %v111
    %v113 = vlaneseq
    %v114 = vshrl.u32 %v113, 7
    %v115 = vsub.s32 3, %v114
    %v116 = vrot.slane %v99, %v115
    %v117 = vlaneseq
    %v118 = vshrl.u32 %v117, 7
    %v119 = vsub.s32 4, %v118
    %v120 = vrot.slane %v99, %v119
    %v121 = vlaneseq
    %v122 = vshrl.u32 %v121, 7
    %v123 = vsub.s32 5, %v122
    %v124 = vrot.slane %v99, %v123
    %vm131 = vcmask 523264
    %v133 = vsel %vm131, %v50, 0
    %135 = vmatprep.subr.mxu0 %v52
    %136 = vmatpush1.msra.mxu0 %v51
    %137 = vmatprep.subr.mxu0 %v58
    %138 = vmatpush1.msra.mxu0 %v57
    %139 = vmatprep.subr.mxu0 %v64
    %140 = vmatpush1.msra.mxu0 %v63
    %141 = vmatprep.subr.mxu0 %v70
    %142 = vmatpush1.msra.mxu0 %v69
    %143 = vmatprep.subr.mxu0 %v76
    %144 = vmatpush1.msra.mxu0 %v75
    %145 = vmatprep.subr.mxu0 %v82
    %146 = vmatpush1.msra.mxu0 %v81
    %147 = vmatprep.subr.mxu0 %v88
    %148 = vmatpush1.msra.mxu0 %v87
    %149 = vmatprep.subr.mxu0 %v94
    %150 = vmatpush1.msra.mxu0 %v93
    %151 = vmatprep.subr.mxu0 0.0
    %152 = vmatpush1.msra.mxu0 0.0
    %153 = vmatprep.subr.mxu0 0.0
    %154 = vmatpush1.msra.mxu0 0.0
    %155 = vmatprep.subr.mxu0 0.0
    %156 = vmatpush1.msra.mxu0 0.0
    %157 = vmatprep.subr.mxu0 0.0
    %158 = vmatpush1.msra.mxu0 0.0
    %159 = vmatprep.subr.mxu0 0.0
    %160 = vmatpush1.msra.mxu0 0.0
    %161 = vmatprep.subr.mxu0 0.0
    %162 = vmatpush1.msra.mxu0 0.0
    %163 = vmatprep.subr.mxu0 0.0
    %164 = vmatpush1.msra.mxu0 0.0
    %165 = vmatprep.subr.mxu0 0.0
    %166 = vmatpush1.msra.mxu0 0.0
    %167 = vmatprep.subr.mxu0 0.0
    %168 = vmatpush1.msra.mxu0 0.0
    %169 = vmatprep.subr.mxu0 0.0
    %170 = vmatpush1.msra.mxu0 0.0
    %171 = vmatprep.subr.mxu0 0.0
    %172 = vmatpush1.msra.mxu0 0.0
    %173 = vmatprep.subr.mxu0 0.0
    %174 = vmatpush1.msra.mxu0 0.0
    %175 = vmatprep.subr.mxu0 0.0
    %176 = vmatpush1.msra.mxu0 0.0
    %177 = vmatprep.subr.mxu0 0.0
    %178 = vmatpush1.msra.mxu0 0.0
    %179 = vmatprep.subr.mxu0 0.0
    %180 = vmatpush1.msra.mxu0 0.0
    %181 = vmatprep.subr.mxu0 0.0
    %182 = vmatpush1.msra.mxu0 0.0
    %183 = vmatprep.subr.mxu0 0.0
    %184 = vmatpush1.msra.mxu0 0.0
    %185 = vmatprep.subr.mxu0 0.0
    %186 = vmatpush1.msra.mxu0 0.0
    %187 = vmatprep.subr.mxu0 0.0
    %188 = vmatpush1.msra.mxu0 0.0
    %189 = vmatprep.subr.mxu0 0.0
    %190 = vmatpush1.msra.mxu0 0.0
    %191 = vmatprep.subr.mxu0 0.0
    %192 = vmatpush1.msra.mxu0 0.0
    %193 = vmatprep.subr.mxu0 0.0
    %194 = vmatpush1.msra.mxu0 0.0
    %195 = vmatprep.subr.mxu0 0.0
    %196 = vmatpush1.msra.mxu0 0.0
    %197 = vmatprep.subr.mxu0 0.0
    %198 = vmatpush1.msra.mxu0 0.0
    %199 = vmatprep.mubr.f32.mxu0 0.0
    %200 = vmatmul.mubr.f32.gmra.mrb[0].mxu0 %v133
    %v201 = vpop.f32.mrb[0].mxu0
    %v202 = vadd.f32 %v104, %v201
    %v203 = vpop.f32.mrb[0].mxu0
    %v204 = vadd.f32 %v108, %v203
    %205 = vdwg.mxu0
    %206 = vmatprep.subr.mxu0 %v54
    %207 = vmatpush1.msra.mxu0 %v53
    %208 = vmatprep.subr.mxu0 %v60
    %209 = vmatpush1.msra.mxu0 %v59
    %210 = vmatprep.subr.mxu0 %v66
    %211 = vmatpush1.msra.mxu0 %v65
    %212 = vmatprep.subr.mxu0 %v72
    %213 = vmatpush1.msra.mxu0 %v71
    %214 = vmatprep.subr.mxu0 %v78
    %215 = vmatpush1.msra.mxu0 %v77
    %216 = vmatprep.subr.mxu0 %v84
    %217 = vmatpush1.msra.mxu0 %v83
    %218 = vmatprep.subr.mxu0 %v90
    %219 = vmatpush1.msra.mxu0 %v89
    %220 = vmatprep.subr.mxu0 %v96
    %221 = vmatpush1.msra.mxu0 %v95
    %222 = vmatprep.subr.mxu0 0.0
    %223 = vmatpush1.msra.mxu0 0.0
    %224 = vmatprep.subr.mxu0 0.0
    %225 = vmatpush1.msra.mxu0 0.0
    %226 = vmatprep.subr.mxu0 0.0
    %227 = vmatpush1.msra.mxu0 0.0
    %228 = vmatprep.subr.mxu0 0.0
    %229 = vmatpush1.msra.mxu0 0.0
    %230 = vmatprep.subr.mxu0 0.0
    %231 = vmatpush1.msra.mxu0 0.0
    %232 = vmatprep.subr.mxu0 0.0
    %233 = vmatpush1.msra.mxu0 0.0
    %234 = vmatprep.subr.mxu0 0.0
    %235 = vmatpush1.msra.mxu0 0.0
    %236 = vmatprep.subr.mxu0 0.0
    %237 = vmatpush1.msra.mxu0 0.0
    %238 = vmatprep.subr.mxu0 0.0
    %239 = vmatpush1.msra.mxu0 0.0
    %240 = vmatprep.subr.mxu0 0.0
    %241 = vmatpush1.msra.mxu0 0.0
    %242 = vmatprep.subr.mxu0 0.0
    %243 = vmatpush1.msra.mxu0 0.0
    %244 = vmatprep.subr.mxu0 0.0
    %245 = vmatpush1.msra.mxu0 0.0
    %246 = vmatprep.subr.mxu0 0.0
    %247 = vmatpush1.msra.mxu0 0.0
    %248 = vmatprep.subr.mxu0 0.0
    %249 = vmatpush1.msra.mxu0 0.0
    %250 = vmatprep.subr.mxu0 0.0
    %251 = vmatpush1.msra.mxu0 0.0
    %252 = vmatprep.subr.mxu0 0.0
    %253 = vmatpush1.msra.mxu0 0.0
    %254 = vmatprep.subr.mxu0 0.0
    %255 = vmatpush1.msra.mxu0 0.0
    %256 = vmatprep.subr.mxu0 0.0
    %257 = vmatpush1.msra.mxu0 0.0
    %258 = vmatprep.subr.mxu0 0.0
    %259 = vmatpush1.msra.mxu0 0.0
    %260 = vmatprep.subr.mxu0 0.0
    %261 = vmatpush1.msra.mxu0 0.0
    %262 = vmatprep.subr.mxu0 0.0
    %263 = vmatpush1.msra.mxu0 0.0
    %264 = vmatprep.subr.mxu0 0.0
    %265 = vmatpush1.msra.mxu0 0.0
    %266 = vmatprep.subr.mxu0 0.0
    %267 = vmatpush1.msra.mxu0 0.0
    %268 = vmatprep.subr.mxu0 0.0
    %269 = vmatpush1.msra.mxu0 0.0
    %270 = vmatprep.mubr.f32.mxu0 0.0
    %271 = vmatmul.mubr.f32.gmra.mrb[0].mxu0 %v133
    %v272 = vpop.f32.mrb[0].mxu0
    %v273 = vadd.f32 %v112, %v272
    %v274 = vpop.f32.mrb[0].mxu0
    %v275 = vadd.f32 %v116, %v274
    %276 = vdwg.mxu0
    %277 = vmatprep.subr.mxu0 %v56
    %278 = vmatpush1.msra.mxu0 %v55
    %279 = vmatprep.subr.mxu0 %v62
    %280 = vmatpush1.msra.mxu0 %v61
    %281 = vmatprep.subr.mxu0 %v68
    %282 = vmatpush1.msra.mxu0 %v67
    %283 = vmatprep.subr.mxu0 %v74
    %284 = vmatpush1.msra.mxu0 %v73
    %285 = vmatprep.subr.mxu0 %v80
    %286 = vmatpush1.msra.mxu0 %v79
    %287 = vmatprep.subr.mxu0 %v86
    %288 = vmatpush1.msra.mxu0 %v85
    %289 = vmatprep.subr.mxu0 %v92
    %290 = vmatpush1.msra.mxu0 %v91
    %291 = vmatprep.subr.mxu0 %v98
    %292 = vmatpush1.msra.mxu0 %v97
    %293 = vmatprep.subr.mxu0 0.0
    %294 = vmatpush1.msra.mxu0 0.0
    %295 = vmatprep.subr.mxu0 0.0
    %296 = vmatpush1.msra.mxu0 0.0
    %297 = vmatprep.subr.mxu0 0.0
    %298 = vmatpush1.msra.mxu0 0.0
    %299 = vmatprep.subr.mxu0 0.0
    %300 = vmatpush1.msra.mxu0 0.0
    %301 = vmatprep.subr.mxu0 0.0
    %302 = vmatpush1.msra.mxu0 0.0
    %303 = vmatprep.subr.mxu0 0.0
    %304 = vmatpush1.msra.mxu0 0.0
    %305 = vmatprep.subr.mxu0 0.0
    %306 = vmatpush1.msra.mxu0 0.0
    %307 = vmatprep.subr.mxu0 0.0
    %308 = vmatpush1.msra.mxu0 0.0
    %309 = vmatprep.subr.mxu0 0.0
    %310 = vmatpush1.msra.mxu0 0.0
    %311 = vmatprep.subr.mxu0 0.0
    %312 = vmatpush1.msra.mxu0 0.0
    %313 = vmatprep.subr.mxu0 0.0
    %314 = vmatpush1.msra.mxu0 0.0
    %315 = vmatprep.subr.mxu0 0.0
    %316 = vmatpush1.msra.mxu0 0.0
    %317 = vmatprep.subr.mxu0 0.0
    %318 = vmatpush1.msra.mxu0 0.0
    %319 = vmatprep.subr.mxu0 0.0
    %320 = vmatpush1.msra.mxu0 0.0
    %321 = vmatprep.subr.mxu0 0.0
    %322 = vmatpush1.msra.mxu0 0.0
    %323 = vmatprep.subr.mxu0 0.0
    %324 = vmatpush1.msra.mxu0 0.0
    %325 = vmatprep.subr.mxu0 0.0
    %326 = vmatpush1.msra.mxu0 0.0
    %327 = vmatprep.subr.mxu0 0.0
    %328 = vmatpush1.msra.mxu0 0.0
    %329 = vmatprep.subr.mxu0 0.0
    %330 = vmatpush1.msra.mxu0 0.0
    %331 = vmatprep.subr.mxu0 0.0
    %332 = vmatpush1.msra.mxu0 0.0
    %333 = vmatprep.subr.mxu0 0.0
    %334 = vmatpush1.msra.mxu0 0.0
    %335 = vmatprep.subr.mxu0 0.0
    %336 = vmatpush1.msra.mxu0 0.0
    %337 = vmatprep.subr.mxu0 0.0
    %338 = vmatpush1.msra.mxu0 0.0
    %339 = vmatprep.subr.mxu0 0.0
    %340 = vmatpush1.msra.mxu0 0.0
    %341 = vmatprep.mubr.f32.mxu0 0.0
    %342 = vmatmul.mubr.f32.gmra.mrb[0].mxu0 %v133
    %v343 = vpop.f32.mrb[0].mxu0
    %v344 = vadd.f32 %v120, %v343
    %v345 = vpop.f32.mrb[0].mxu0
    %v346 = vadd.f32 %v124, %v345
    %347 = vdwg.mxu0
    %v354 = vcombine.low %v202, %v204
    %v355 = vcombine.low %v273, %v275
    %v357 = vunpack.c.l.s4 1983009808
    %v358 = vunpack.c.0.s8 %v357
    %v359 = vlaneseq
    %v360 = vshrl.u32 %v359, 7
    %v361 = vsub.s32 %v358, %v360
    %v362 = vrot.slane %v354, %v361
    %v364 = vunpack.c.l.s4 1983009808
    %v365 = vunpack.c.0.s8 %v364
    %v366 = vlaneseq
    %v367 = vshrl.u32 %v366, 7
    %v368 = vsub.s32 %v365, %v367
    %v369 = vrot.slane %v355, %v368
    %v370 = vcombine.low %v362, %v369
    %v371 = vcombine.low %v344, %v346
    %v373 = vunpack.c.l.s4 1983009808
    %v374 = vunpack.c.0.s8 %v373
    %v375 = vlaneseq
    %v376 = vshrl.u32 %v375, 7
    %v377 = vsub.s32 %v374, %v376
    %v378 = vrot.slane %v371, %v377
    %381 = vst [vmem:[#allocation7] sm:$0xff] %v370
    %382 = vst [vmem:[#allocation7 + $0x8] sm:$0xf] %v378
    // Predicated region
    $region26: #{tpu_custom_call.1} parent=1 // pred_check
      _
    $region27: #{tpu_custom_call.1} parent=1 // pred_check_branch
      %384 = sbr.rel (0) target = $region29
    $region28: #{tpu_custom_call.1} parent=1 // pred_region
      %s386 = ssub.s32 192, 192
      %387 = vsyncadd [#allocation4], %s386
      %s389 = sshll.u32 [#allocation7], 4
      %s390 = int_to_ptr.vmem [resolvable:$true] %s389
      %392 = dma.vmem_to_hbm [thread:$0]  %s390, 192, %s4, [#allocation4]
    $region29: #{tpu_custom_call.1} parent=1 // pred_fallthru
      _
    // Predicated region
    $region30: #{tpu_custom_call.1} parent=1 // pred_check
      _
    $region31: #{tpu_custom_call.1} parent=1 // pred_check_branch
      %394 = sbr.rel (0) target = $region33
    $region32: #{tpu_custom_call.1} parent=1 // pred_region
      %395 = dma.done [#allocation4], 192
    $region33: #{tpu_custom_call.1} parent=1 // pred_fallthru
      _
    %396 = vsyncpa [#allocation3], 1
    %397 = vsyncpa [#allocation6], 1
    %398 = vsyncpa [#allocation4], 1

</llo_original>
